<compile_context>
chip_gen: v7x
topology: tpu7x:2x2x1
jax: 0.10.0
libtpu: 0.0.40
codegen_flags: <defaults>
</compile_context>

<pallas_src>
import jax
import jax.numpy as jnp
import numpy as np
from jax.experimental import pallas as pl
from jax.experimental.pallas import tpu as pltpu


# ---------------------------------------------------------------------------
# Pallas kernel: single (L, Din) @ (Din, Dout) + bias projection (no grid).
# All block shapes equal the full array shapes, so the (8,128) tiling rule is
# satisfied trivially and everything lives in VMEM for the one invocation.
# ---------------------------------------------------------------------------
def mapper_kernel(const_ref, w_ref, b_ref, out_ref):
    # const_ref: (L, Din)    the `const` rows selected by cat(...)[ :, -L:]
    # w_ref:     (Din, Dout) up.weight.T
    # b_ref:     (1, Dout)   up.bias
    # out_ref:   (L, Dout)   cognition_embeds for one (== every) batch element
    out_ref[...] = (
        jnp.dot(const_ref[...], w_ref[...], preferred_element_type=jnp.float32)
        + b_ref[...]
    )


def mapping_network_forward(cognition, const, w_up, b_up):
    """Exact semantics of MappingNetwork.forward + the cognition_mask line of
    COGMAPL.forward.

    cognition: (B, S, Din) float32  (unused by the math: the [:, -L:] slice in
               the torch code always drops it — faithfully reproduced here)
    const:     (L, Din)    float32  (nn.Parameter)
    w_up:      (Dout, Din) float32  (nn.Linear.weight)
    b_up:      (Dout,)     float32  (nn.Linear.bias)
    returns:   cognition_embeds (B, L, Dout) float32, cognition_mask (B, L) int32
    """
    B = cognition.shape[0]
    L, Din = const.shape
    Dout = w_up.shape[0]

    # `.to(torch.float32)` before the Linear.
    const_f32 = const.astype(jnp.float32)
    w = jnp.transpose(w_up).astype(jnp.float32)   # (Din, Dout): y = x @ W.T + b
    b = b_up.reshape(1, Dout).astype(jnp.float32)

    out_one = pl.pallas_call(
        mapper_kernel,
        out_shape=jax.ShapeDtypeStruct((L, Dout), jnp.float32),
    )(const_f32, w, b)

    # Batch-invariant result — broadcast, don't recompute.
    cognition_embeds = jnp.broadcast_to(out_one[None], (B, L, Dout))

    # cognition_mask = (embeds != -1).any(-1).long()
    # NOTE: exact float-equality test on matmul outputs (matches torch
    # semantics; all-ones in practice). Trivial reduction -> plain JAX.
    mask_one = jnp.any(out_one != -1.0, axis=-1).astype(jnp.int32)   # (L,)
    cognition_mask = jnp.broadcast_to(mask_one[None], (B, L))
    return cognition_embeds, cognition_mask


# ---------------------------------------------------------------------------
# COGMAPL.forward (kernel-able portion): embed_cognition + concat + masks.
# ---------------------------------------------------------------------------
def cogmapl_forward(cognition, target_embeds, target_token_mask,
                    const, w_up, b_up):
    cognition_embeds, cognition_mask = mapping_network_forward(
        cognition, const, w_up, b_up)
    # prefix_ids is None branch:
    input_embeds = jnp.concatenate([target_embeds, cognition_embeds], axis=1)
    attention_mask = jnp.concatenate(
        [target_token_mask.astype(jnp.int32), cognition_mask], axis=1)
    # TODO(synk): accumulate_padding + language_decoder(inputs_embeds, ...) are
    #             a full transformer sequence-classifier; not translated.
    return input_embeds, attention_mask, cognition_embeds, cognition_mask


if __name__ == "__main__":
    # Small, module-consistent shapes: cognition_type='ET' -> input_dim=4,
    # embed_dim (decoder hidden) = 32, mapper output_length = 41.
    B, S, DIN, DOUT, L = 2, 8, 4, 32, 41

    key = jax.random.PRNGKey(0)
    k_cog, k_const, k_w, k_b, k_txt = jax.random.split(key, 5)

    cognition = jax.random.normal(k_cog, (B, S, DIN), dtype=jnp.float32)
    const = jax.random.normal(k_const, (L, DIN), dtype=jnp.float32)          # mapper.const
    w_up = 0.05 * jax.random.normal(k_w, (DOUT, DIN), dtype=jnp.float32)     # mapper.up.weight
    b_up = 0.01 * jax.random.normal(k_b, (DOUT,), dtype=jnp.float32)         # mapper.up.bias

    # Stand-in for frozen text embeddings (embed_text) and its token mask.
    target_embeds = jax.random.normal(k_txt, (B, S, DOUT), dtype=jnp.float32)
    target_token_mask = jnp.ones((B, S), dtype=jnp.int32)

    input_embeds, attention_mask, cog_embeds, cog_mask = jax.block_until_ready(
        cogmapl_forward(cognition, target_embeds, target_token_mask,
                        const, w_up, b_up))

    # Pure-JAX reference that mirrors the torch code literally
    # (cat + [:, -L:] + Linear + mask).
    x_ref = jnp.concatenate(
        [cognition, jnp.broadcast_to(const[None], (B, L, DIN))], axis=1)[:, -L:]
    ref = jnp.einsum("bld,ed->ble", x_ref.astype(jnp.float32), w_up) + b_up
    ref_mask = jnp.any(ref != -1.0, axis=-1).astype(jnp.int32)

    np.testing.assert_allclose(np.asarray(cog_embeds), np.asarray(ref),
                               rtol=1e-5, atol=1e-5)
    np.testing.assert_array_equal(np.asarray(cog_mask), np.asarray(ref_mask))
    assert input_embeds.shape == (B, S + L, DOUT)
    assert attention_mask.shape == (B, S + L)

    print("KERNEL_OK")
</pallas_src>

<mosaic_0001>
module attributes {stable_mosaic.version = 11 : i64} {
  func.func @mapper_kernel(%arg0: memref<41x4xf32, #tpu.memory_space<vmem>>, %arg1: memref<4x32xf32, #tpu.memory_space<vmem>>, %arg2: memref<1x32xf32, #tpu.memory_space<vmem>>, %arg3: memref<41x32xf32, #tpu.memory_space<vmem>>) attributes {dimension_semantics = [], scalar_prefetch = 0 : i64, scratch_operands = 0 : i64, tpu.core_type = #tpu.core_type<tc>} {
    %c0 = arith.constant 0 : index
    %c0_0 = arith.constant 0 : index
    %0 = vector.load %arg0[%c0, %c0_0] : memref<41x4xf32, #tpu.memory_space<vmem>>, vector<41x4xf32>
    %c0_1 = arith.constant 0 : index
    %c0_2 = arith.constant 0 : index
    %1 = vector.load %arg1[%c0_1, %c0_2] : memref<4x32xf32, #tpu.memory_space<vmem>>, vector<4x32xf32>
    %cst = arith.constant dense<0.000000e+00> : vector<41x32xf32>
    %2 = tpu.matmul %0, %1, %cst {dimension_numbers = #tpu.dot_dimension_numbers<[1], [0], [0], [1], [0, 0, 1, 1], [], []>} : vector<41x4xf32>, vector<4x32xf32>, vector<41x32xf32> -> vector<41x32xf32>
    %c0_3 = arith.constant 0 : index
    %c0_4 = arith.constant 0 : index
    %3 = vector.load %arg2[%c0_3, %c0_4] : memref<1x32xf32, #tpu.memory_space<vmem>>, vector<1x32xf32>
    %4 = vector.broadcast %3 : vector<1x32xf32> to vector<41x32xf32>
    %5 = arith.addf %2, %4 : vector<41x32xf32>
    %c0_5 = arith.constant 0 : index
    %c0_6 = arith.constant 0 : index
    %6 = vector.load %arg3[%c0_5, %c0_6] : memref<41x32xf32, #tpu.memory_space<vmem>>, vector<41x32xf32>
    tpu.vector_store %arg3[%c0_5, %c0_6], %5 {strides = array<i32>} : memref<41x32xf32, #tpu.memory_space<vmem>>, vector<41x32xf32>,
    return
  }
}

</mosaic_0001>

<llo_original>
// kernel: tpu_custom_call.1
$region0: #{tpu_custom_call.1}
  #allocation0 [shape = 'u32[]', space=smem, size = 0x4, offset = 0x4, fixed_abs, tag = 'smem constant byte address 0x4 - core index']
  #allocation1 [shape = 'u32[144,128]{1,0:T(1,128)}', space=vmem, size = 0x12000, scoped, tag = 'internal scratch']
  %s0 = inlined_call_operand.vmem [shape: f32[41,4], index: 0, kind: input, shape index: {}]
  %s1 = inlined_call_operand.vmem [shape: f32[4,32], index: 1, kind: input, shape index: {}]
  %s2 = inlined_call_operand.vmem [shape: f32[1,32], index: 2, kind: input, shape index: {}]
  %s3 = inlined_call_operand.vmem [shape: f32[41,32], index: 3, kind: output, shape index: {}]
  %s4 = sld [smem:[#allocation0]]
  $region22: #{tpu_custom_call.1} parent=0
    _
  %s6 = ssub.s32 1, %s4
  %s7 = scalar_select 0, %s6, %s4
  // Predicated region
  $region2: #{tpu_custom_call.1} parent=0 // pred_check
    _
  $region3: #{tpu_custom_call.1} parent=0 // pred_check_branch
    %9 = sbr.rel (0) target = $region5
  $region4: #{tpu_custom_call.1} parent=0 // pred_region
    _
  $region5: #{tpu_custom_call.1} parent=0 // pred_fallthru
    _
  // Predicated region
  $region6: #{tpu_custom_call.1} parent=0 // pred_check
    _
  $region7: #{tpu_custom_call.1} parent=0 // pred_check_branch
    %11 = sbr.rel (0) target = $region9
  $region8: #{tpu_custom_call.1} parent=0 // pred_region
    _
  $region9: #{tpu_custom_call.1} parent=0 // pred_fallthru
    _
  // Predicated region
  $region10: #{tpu_custom_call.1} parent=0 // pred_check
    _
  $region11: #{tpu_custom_call.1} parent=0 // pred_check_branch
    %13 = sbr.rel (0) target = $region13
  $region12: #{tpu_custom_call.1} parent=0 // pred_region
    _
  $region13: #{tpu_custom_call.1} parent=0 // pred_fallthru
    _
  %v14 = vld [vmem:[%s0] sm:$0xff]
  %v15 = vld [vmem:[%s0 + $0x8] sm:$0xff]
  %v16 = vld [vmem:[%s0 + $0x10] sm:$0xff]
  %v17 = vld [vmem:[%s0 + $0x18] sm:$0xff]
  %v18 = vld [vmem:[%s0 + $0x20] sm:$0xff]
  %v19 = vld [vmem:[%s0 + $0x28] sm:$0x1]
  %v20 = vld [vmem:[%s1] sm:$0xf]
  %v21 = vld [vmem:[%s2] sm:$0x1]
  %v23 = vlaneseq
  %v24 = vshrl.u32 %v23, 7
  %v25 = vsub.s32 0, %v24
  %v26 = vrot.slane %v21, %v25
  %vm28 = vcmask 31744
  %v30 = vsel %vm28, %v14, 0
  %v33 = vsel %vm28, %v15, 0
  %v36 = vsel %vm28, %v16, 0
  %v39 = vsel %vm28, %v17, 0
  %v42 = vsel %vm28, %v18, 0
  %v45 = vsel %vm28, %v19, 0
  %vm47 = vcmask 1043456
  %v49 = vsel %vm47, %v20, 0
  %51 = vmatprep.subr.mxu0 0.0
  %52 = vmatpush1.msra.mxu0 %v49
  %53 = vmatprep.subr.mxu0 0.0
  %54 = vmatpush1.msra.mxu0 0.0
  %55 = vmatprep.subr.mxu0 0.0
  %56 = vmatpush1.msra.mxu0 0.0
  %57 = vmatprep.subr.mxu0 0.0
  %58 = vmatpush1.msra.mxu0 0.0
  %59 = vmatprep.subr.mxu0 0.0
  %60 = vmatpush1.msra.mxu0 0.0
  %61 = vmatprep.subr.mxu0 0.0
  %62 = vmatpush1.msra.mxu0 0.0
  %63 = vmatprep.subr.mxu0 0.0
  %64 = vmatpush1.msra.mxu0 0.0
  %65 = vmatprep.subr.mxu0 0.0
  %66 = vmatpush1.msra.mxu0 0.0
  %67 = vmatprep.subr.mxu0 0.0
  %68 = vmatpush1.msra.mxu0 0.0
  %69 = vmatprep.subr.mxu0 0.0
  %70 = vmatpush1.msra.mxu0 0.0
  %71 = vmatprep.subr.mxu0 0.0
  %72 = vmatpush1.msra.mxu0 0.0
  %73 = vmatprep.subr.mxu0 0.0
  %74 = vmatpush1.msra.mxu0 0.0
  %75 = vmatprep.subr.mxu0 0.0
  %76 = vmatpush1.msra.mxu0 0.0
  %77 = vmatprep.subr.mxu0 0.0
  %78 = vmatpush1.msra.mxu0 0.0
  %79 = vmatprep.subr.mxu0 0.0
  %80 = vmatpush1.msra.mxu0 0.0
  %81 = vmatprep.subr.mxu0 0.0
  %82 = vmatpush1.msra.mxu0 0.0
  %83 = vmatprep.subr.mxu0 0.0
  %84 = vmatpush1.msra.mxu0 0.0
  %85 = vmatprep.subr.mxu0 0.0
  %86 = vmatpush1.msra.mxu0 0.0
  %87 = vmatprep.subr.mxu0 0.0
  %88 = vmatpush1.msra.mxu0 0.0
  %89 = vmatprep.subr.mxu0 0.0
  %90 = vmatpush1.msra.mxu0 0.0
  %91 = vmatprep.subr.mxu0 0.0
  %92 = vmatpush1.msra.mxu0 0.0
  %93 = vmatprep.subr.mxu0 0.0
  %94 = vmatpush1.msra.mxu0 0.0
  %95 = vmatprep.subr.mxu0 0.0
  %96 = vmatpush1.msra.mxu0 0.0
  %97 = vmatprep.subr.mxu0 0.0
  %98 = vmatpush1.msra.mxu0 0.0
  %99 = vmatprep.subr.mxu0 0.0
  %100 = vmatpush1.msra.mxu0 0.0
  %101 = vmatprep.subr.mxu0 0.0
  %102 = vmatpush1.msra.mxu0 0.0
  %103 = vmatprep.subr.mxu0 0.0
  %104 = vmatpush1.msra.mxu0 0.0
  %105 = vmatprep.subr.mxu0 0.0
  %106 = vmatpush1.msra.mxu0 0.0
  %107 = vmatprep.subr.mxu0 0.0
  %108 = vmatpush1.msra.mxu0 0.0
  %109 = vmatprep.subr.mxu0 0.0
  %110 = vmatpush1.msra.mxu0 0.0
  %111 = vmatprep.subr.mxu0 0.0
  %112 = vmatpush1.msra.mxu0 0.0
  %113 = vmatprep.subr.mxu0 0.0
  %114 = vmatpush1.msra.mxu0 0.0
  %115 = vmatprep.mubr.f32.mxu0 0.0
  %116 = vmatmul.mubr.f32.gmra.mrb[0].mxu0 %v30
  %v117 = vpop.f32.mrb[0].mxu0
  %v118 = vadd.f32 %v26, %v117
  %v119 = vpop.f32.mrb[0].mxu0
  %120 = vmatprep.mubr.f32.mxu0 0.0
  %121 = vmatmul.mubr.f32.gmra.mrb[0].mxu0 %v33
  %v122 = vpop.f32.mrb[0].mxu0
  %v123 = vadd.f32 %v26, %v122
  %v124 = vpop.f32.mrb[0].mxu0
  %125 = vmatprep.mubr.f32.mxu0 0.0
  %126 = vmatmul.mubr.f32.gmra.mrb[0].mxu0 %v36
  %v127 = vpop.f32.mrb[0].mxu0
  %v128 = vadd.f32 %v26, %v127
  %v129 = vpop.f32.mrb[0].mxu0
  %130 = vmatprep.mubr.f32.mxu0 0.0
  %131 = vmatmul.mubr.f32.gmra.mrb[0].mxu0 %v39
  %v132 = vpop.f32.mrb[0].mxu0
  %v133 = vadd.f32 %v26, %v132
  %v134 = vpop.f32.mrb[0].mxu0
  %135 = vmatprep.mubr.f32.mxu0 0.0
  %136 = vmatmul.mubr.f32.gmra.mrb[0].mxu0 %v42
  %v137 = vpop.f32.mrb[0].mxu0
  %v138 = vadd.f32 %v26, %v137
  %v139 = vpop.f32.mrb[0].mxu0
  %140 = vmatprep.mubr.f32.mxu0 0.0
  %141 = vmatmul.mubr.f32.gmra.mrb[0].mxu0 %v45
  %v142 = vpop.f32.mrb[0].mxu0
  %v143 = vadd.f32 %v26, %v142
  %v144 = vpop.f32.mrb[0].mxu0
  %145 = vdwg.mxu0
  %vm146 = vcmask 261120
  %147 = vst.msk [vmem:[%s3] sm:$0xff] %vm146, %v118
  %148 = vst.msk [vmem:[%s3 + $0x8] sm:$0xff] %vm146, %v123
  %149 = vst.msk [vmem:[%s3 + $0x10] sm:$0xff] %vm146, %v128
  %150 = vst.msk [vmem:[%s3 + $0x18] sm:$0xff] %vm146, %v133
  %151 = vst.msk [vmem:[%s3 + $0x20] sm:$0xff] %vm146, %v138
  %vm152 = vcmask 253952
  %153 = vst.msk [vmem:[%s3 + $0x28] sm:$0x1] %vm152, %v143
  // Predicated region
  $region14: #{tpu_custom_call.1} parent=0 // pred_check
    _
  $region15: #{tpu_custom_call.1} parent=0 // pred_check_branch
    %155 = sbr.rel (0) target = $region17
  $region16: #{tpu_custom_call.1} parent=0 // pred_region
    _
  $region17: #{tpu_custom_call.1} parent=0 // pred_fallthru
    _
  // Predicated region
  $region18: #{tpu_custom_call.1} parent=0 // pred_check
    _
  $region19: #{tpu_custom_call.1} parent=0 // pred_check_branch
    %157 = sbr.rel (0) target = $region21
  $region20: #{tpu_custom_call.1} parent=0 // pred_region
    _
  $region21: #{tpu_custom_call.1} parent=0 // pred_fallthru
    _

</llo_original>
